<compile_context>
chip_gen: v5e
topology: v5e:2x2
jax: 0.10.0
libtpu: 0.0.40
codegen_flags: <defaults>
</compile_context>

<pallas_src>
import functools

import jax
import jax.numpy as jnp
from jax.experimental import pallas as pl
from jax.experimental.pallas import tpu as pltpu

BN_EPS = 0.8          # nn.BatchNorm1d(out_feat, 0.8) -> eps = 0.8
LRELU_SLOPE = 0.2
H1, H2, OUT_F = 20, 10, 5

# Rows of the packed per-layer-vector table (shape (5, H1)):
ROW_G1, ROW_BE1, ROW_G2, ROW_BE2, ROW_B3 = 0, 1, 2, 3, 4


def _leaky_relu(x):
    return jnp.where(x > 0, x, LRELU_SLOPE * x)


def _bn_scale_shift(sum_row, sumsq_row, gamma, beta, inv_n):
    """Fold training-mode BatchNorm1d into a single (scale, shift) pair.

    var = E[x^2] - mu^2 (single reduction pass).  With eps = 0.8 the rsqrt is
    far from the cancellation-sensitive region; switch to the centered
    two-pass form if bit-level parity with PyTorch ever matters.
    """
    mu = sum_row * inv_n
    var = sumsq_row * inv_n - mu * mu
    scale = gamma * jax.lax.rsqrt(var + BN_EPS)      # rsqrt -> EUP slot
    shift = beta - mu * scale
    return scale, shift


def _unpack_vecs(vec_ref):
    g1 = vec_ref[ROW_G1:ROW_G1 + 1, :H1]
    be1 = vec_ref[ROW_BE1:ROW_BE1 + 1, :H1]
    g2 = vec_ref[ROW_G2:ROW_G2 + 1, :H2]
    be2 = vec_ref[ROW_BE2:ROW_BE2 + 1, :H2]
    b3 = vec_ref[ROW_B3:ROW_B3 + 1, :OUT_F]
    return g1, be1, g2, be2, b3


def _linear1(a, z, w1a_ref, w1z_ref):
    # Linear(sensitive+latent, 20) with torch.cat((a, z), -1) folded into two
    # matmuls on the split weight.  No bias: it is cancelled exactly by the
    # batch-mean subtraction of the following training-mode BatchNorm.
    return (jnp.dot(a, w1a_ref[...], preferred_element_type=jnp.float32)
            + jnp.dot(z, w1z_ref[...], preferred_element_type=jnp.float32))


# --------------------------------------------------------------------------
# Small-batch path: one whole-batch-resident kernel.
# --------------------------------------------------------------------------
def _whole_batch_kernel(a_ref, z_ref, w1a_ref, w1z_ref, w2_ref, w3_ref,
                        vec_ref, out_ref):
    g1, be1, g2, be2, b3 = _unpack_vecs(vec_ref)
    inv_n = 1.0 / a_ref.shape[0]

    h = _linear1(a_ref[...], z_ref[...], w1a_ref, w1z_ref)
    scale, shift = _bn_scale_shift(jnp.sum(h, axis=0, keepdims=True),
                                   jnp.sum(h * h, axis=0, keepdims=True),
                                   g1, be1, inv_n)
    h = _leaky_relu(h * scale + shift)

    h = jnp.dot(h, w2_ref[...], preferred_element_type=jnp.float32)  # bias dead
    scale, shift = _bn_scale_shift(jnp.sum(h, axis=0, keepdims=True),
                                   jnp.sum(h * h, axis=0, keepdims=True),
                                   g2, be2, inv_n)
    h = _leaky_relu(h * scale + shift)

    # Final Linear(10, 5) + Tanh, stored at native (B, 5) width (no padding).
    out_ref[...] = jnp.tanh(
        jnp.dot(h, w3_ref[...], preferred_element_type=jnp.float32) + b3)


# --------------------------------------------------------------------------
# Large-batch path, pass 1: batch statistics (two phases over batch tiles).
# --------------------------------------------------------------------------
def _bn_stats_kernel(batch, a_ref, z_ref, w1a_ref, w1z_ref, w2_ref, vec_ref,
                     bn1_ref, bn2_ref):
    """grid = (2, num_tiles): phase 0 accumulates layer-1 sum / sum-sq, phase 1
    replays layer 1 with the finalized stats and accumulates layer-2 stats.
    bn*_ref are resident output blocks used as accumulators; at finalize time
    they are overwritten in place with the folded (scale, shift) rows."""
    p = pl.program_id(0)
    t = pl.program_id(1)
    last_t = pl.num_programs(1) - 1
    g1, be1, g2, be2, _ = _unpack_vecs(vec_ref)
    inv_n = 1.0 / batch

    tile = a_ref.shape[0]
    # Mask rows past the true batch size (last tile when batch % tile != 0).
    row = t * tile + jax.lax.broadcasted_iota(jnp.int32, (tile, 1), 0)
    valid = row < batch

    h1 = _linear1(a_ref[...], z_ref[...], w1a_ref, w1z_ref)

    @pl.when((p == 0) & (t == 0))
    def _():
        bn1_ref[...] = jnp.zeros_like(bn1_ref)
        bn2_ref[...] = jnp.zeros_like(bn2_ref)

    @pl.when(p == 0)
    def _():
        hm = jnp.where(valid, h1, 0.0)
        bn1_ref[0:1, :] += jnp.sum(hm, axis=0, keepdims=True)
        bn1_ref[1:2, :] += jnp.sum(hm * hm, axis=0, keepdims=True)

    @pl.when(p == 1)
    def _():
        @pl.when(t == 0)
        def _():
            scale, shift = _bn_scale_shift(bn1_ref[0:1, :], bn1_ref[1:2, :],
                                           g1, be1, inv_n)
            bn1_ref[0:1, :] = scale
            bn1_ref[1:2, :] = shift

        h = _leaky_relu(h1 * bn1_ref[0:1, :] + bn1_ref[1:2, :])
        h2 = jnp.dot(h, w2_ref[...], preferred_element_type=jnp.float32)
        hm = jnp.where(valid, h2, 0.0)
        bn2_ref[0:1, :] += jnp.sum(hm, axis=0, keepdims=True)
        bn2_ref[1:2, :] += jnp.sum(hm * hm, axis=0, keepdims=True)

        @pl.when(t == last_t)
        def _():
            scale, shift = _bn_scale_shift(bn2_ref[0:1, :], bn2_ref[1:2, :],
                                           g2, be2, inv_n)
            bn2_ref[0:1, :] = scale
            bn2_ref[1:2, :] = shift


# --------------------------------------------------------------------------
# Large-batch path, pass 2: apply (independent per batch tile).
# --------------------------------------------------------------------------
def _apply_kernel(a_ref, z_ref, w1a_ref, w1z_ref, w2_ref, w3_ref, vec_ref,
                  bn1_ref, bn2_ref, out_ref):
    _, _, _, _, b3 = _unpack_vecs(vec_ref)
    h = _linear1(a_ref[...], z_ref[...], w1a_ref, w1z_ref)
    h = _leaky_relu(h * bn1_ref[0:1, :] + bn1_ref[1:2, :])
    h = jnp.dot(h, w2_ref[...], preferred_element_type=jnp.float32)
    h = _leaky_relu(h * bn2_ref[0:1, :] + bn2_ref[1:2, :])
    out_ref[...] = jnp.tanh(
        jnp.dot(h, w3_ref[...], preferred_element_type=jnp.float32) + b3)


def generator_forward(z, a, params, *, batch_tile=1024, whole_batch_max=2048):
    """z: (B, latent_dim), a: (B, sensitive_dim) -> (B, 5) float32."""
    batch, latent_dim = z.shape
    sensitive_dim = a.shape[1]
    w1a, w1z = params["w1_a"], params["w1_z"]
    w2, w3, vecs = params["w2"], params["w3"], params["vecs"]

    if batch <= whole_batch_max:
        # Small batch: single whole-batch-resident kernel (one dispatch, one
        # read of (a, z), one (B, 5) write).  No vmem_limit override needed:
        # the footprint is far below the default scoped VMEM on every chip.
        vmem = pl.BlockSpec(memory_space=pltpu.MemorySpace.VMEM)
        return pl.pallas_call(
            _whole_batch_kernel,
            out_shape=jax.ShapeDtypeStruct((batch, OUT_F), jnp.float32),
            in_specs=[vmem] * 7,
            out_specs=vmem,
        )(a, z, w1a, w1z, w2, w3, vecs)

    # Large batch: batch grid + two-pass BatchNorm.  VMEM is O(tile), the tile
    # DMAs pipeline, and the apply pass is batch-parallel.
    tile = min(batch_tile, batch)
    assert tile % 8 == 0, "batch tile must be a multiple of 8 sublanes"
    num_tiles = (batch + tile - 1) // tile

    # Pass 1: batch statistics (sequential over tiles; both axes "arbitrary"
    # because the stats outputs accumulate across the whole grid).
    bn1, bn2 = pl.pallas_call(
        functools.partial(_bn_stats_kernel, batch),
        out_shape=(jax.ShapeDtypeStruct((2, H1), jnp.float32),
                   jax.ShapeDtypeStruct((2, H2), jnp.float32)),
        grid=(2, num_tiles),
        in_specs=[
            pl.BlockSpec((tile, sensitive_dim), lambda p, t: (t, 0)),
            pl.BlockSpec((tile, latent_dim), lambda p, t: (t, 0)),
            pl.BlockSpec(w1a.shape, lambda p, t: (0, 0)),
            pl.BlockSpec(w1z.shape, lambda p, t: (0, 0)),
            pl.BlockSpec(w2.shape, lambda p, t: (0, 0)),
            pl.BlockSpec(vecs.shape, lambda p, t: (0, 0)),
        ],
        out_specs=(
            pl.BlockSpec((2, H1), lambda p, t: (0, 0)),
            pl.BlockSpec((2, H2), lambda p, t: (0, 0)),
        ),
        compiler_params=pltpu.CompilerParams(
            dimension_semantics=("arbitrary", "arbitrary")),
    )(a, z, w1a, w1z, w2, vecs)

    # Pass 2: apply.  Tiles are independent -> "parallel", so v7x shards the
    # batch axis across both TensorCores (no-op on v5e/v6e).
    return pl.pallas_call(
        _apply_kernel,
        out_shape=jax.ShapeDtypeStruct((batch, OUT_F), jnp.float32),
        grid=(num_tiles,),
        in_specs=[
            pl.BlockSpec((tile, sensitive_dim), lambda t: (t, 0)),
            pl.BlockSpec((tile, latent_dim), lambda t: (t, 0)),
            pl.BlockSpec(w1a.shape, lambda t: (0, 0)),
            pl.BlockSpec(w1z.shape, lambda t: (0, 0)),
            pl.BlockSpec(w2.shape, lambda t: (0, 0)),
            pl.BlockSpec(w3.shape, lambda t: (0, 0)),
            pl.BlockSpec(vecs.shape, lambda t: (0, 0)),
            pl.BlockSpec((2, H1), lambda t: (0, 0)),
            pl.BlockSpec((2, H2), lambda t: (0, 0)),
        ],
        out_specs=pl.BlockSpec((tile, OUT_F), lambda t: (t, 0)),
        compiler_params=pltpu.CompilerParams(
            dimension_semantics=("parallel",)),
    )(a, z, w1a, w1z, w2, w3, vecs, bn1, bn2)


def pack_vectors(g1, be1, g2, be2, b3):
    """Pack the small per-layer vectors into one (5, 20) table so the kernels
    take one tiny input instead of five."""
    vecs = jnp.zeros((5, H1), jnp.float32)
    vecs = vecs.at[ROW_G1, :H1].set(g1.reshape(-1))
    vecs = vecs.at[ROW_BE1, :H1].set(be1.reshape(-1))
    vecs = vecs.at[ROW_G2, :H2].set(g2.reshape(-1))
    vecs = vecs.at[ROW_BE2, :H2].set(be2.reshape(-1))
    vecs = vecs.at[ROW_B3, :OUT_F].set(b3.reshape(-1))
    return vecs


def init_params(key, latent_dim, sensitive_dim):
    """PyTorch defaults: Linear U(-k, k), k = 1/sqrt(fan_in); BatchNorm1d
    gamma=1, beta=0.  b1/b2 are not created: any bias feeding straight into a
    training-mode BatchNorm is cancelled by the batch-mean subtraction, so the
    forward output is identical for every choice of b1/b2 (demonstrated by the
    reference check in __main__)."""
    def linear(k, fan_in, fan_out):
        kw, kb = jax.random.split(k)
        bound = 1.0 / jnp.sqrt(fan_in)
        w = jax.random.uniform(kw, (fan_in, fan_out), jnp.float32, -bound, bound)
        b = jax.random.uniform(kb, (1, fan_out), jnp.float32, -bound, bound)
        return w, b

    in_dim = latent_dim + sensitive_dim
    k1, k2, k3 = jax.random.split(key, 3)
    w1, _ = linear(k1, in_dim, H1)      # bias dead under training-mode BN
    w2, _ = linear(k2, H1, H2)          # bias dead under training-mode BN
    w3, b3 = linear(k3, H2, OUT_F)

    return {
        # Split along rows to fold torch.cat((a, z), -1) into the kernel:
        # rows [0:sensitive_dim] multiply `a`, the rest multiply `z`.
        "w1_a": w1[:sensitive_dim, :],
        "w1_z": w1[sensitive_dim:, :],
        "w2": w2,
        "w3": w3,
        "vecs": pack_vectors(jnp.ones((H1,), jnp.float32),
                             jnp.zeros((H1,), jnp.float32),
                             jnp.ones((H2,), jnp.float32),
                             jnp.zeros((H2,), jnp.float32),
                             b3),
    }


def generator_reference(z, a, params, b1, b2):
    """Pure-JAX reference of the PyTorch forward (training-mode BatchNorm,
    centered two-pass variance).  Takes explicit layer-1/2 biases to prove the
    kernels (which omit them) are exact."""
    x = jnp.concatenate([a, z], axis=-1)
    w1 = jnp.concatenate([params["w1_a"], params["w1_z"]], axis=0)
    vecs = params["vecs"]
    g1, be1 = vecs[ROW_G1, :H1], vecs[ROW_BE1, :H1]
    g2, be2 = vecs[ROW_G2, :H2], vecs[ROW_BE2, :H2]
    b3 = vecs[ROW_B3, :OUT_F]

    def bn_lrelu(h, gamma, beta):
        mu = jnp.mean(h, axis=0, keepdims=True)
        var = jnp.mean((h - mu) ** 2, axis=0, keepdims=True)   # biased, like torch
        h = (h - mu) * jax.lax.rsqrt(var + BN_EPS) * gamma + beta
        return jnp.where(h > 0, h, LRELU_SLOPE * h)

    h = bn_lrelu(x @ w1 + b1, g1, be1)
    h = bn_lrelu(h @ params["w2"] + b2, g2, be2)
    return jnp.tanh(h @ params["w3"] + b3)


if __name__ == "__main__":
    latent_dim, sensitive_dim = 8, 4
    key = jax.random.PRNGKey(0)
    kp, kb1, kb2, k0, k1, k2, k3 = jax.random.split(key, 7)
    params = init_params(kp, latent_dim, sensitive_dim)
    # Nonzero biases used ONLY by the reference, to demonstrate that dropping
    # them in the kernels is mathematically exact.
    b1 = jax.random.normal(kb1, (1, H1), jnp.float32)
    b2 = jax.random.normal(kb2, (1, H2), jnp.float32)

    # 1) Small batch -> whole-batch-resident single kernel.
    z_s = jax.random.normal(k0, (8, latent_dim), jnp.float32)
    a_s = jax.random.normal(k1, (8, sensitive_dim), jnp.float32)
    out_s = jax.block_until_ready(generator_forward(z_s, a_s, params))
    ref_s = generator_reference(z_s, a_s, params, b1, b2)
    assert out_s.shape == (8, OUT_F)
    assert bool(jnp.all(jnp.isfinite(out_s)))
    assert bool(jnp.all(jnp.abs(out_s) <= 1.0))
    assert float(jnp.max(jnp.abs(out_s - ref_s))) < 1e-4

    # 2) Larger batch -> gridded two-pass-BatchNorm path (4 tiles of 128 rows).
    z_l = jax.random.normal(k2, (512, latent_dim), jnp.float32)
    a_l = jax.random.normal(k3, (512, sensitive_dim), jnp.float32)
    out_l = jax.block_until_ready(
        generator_forward(z_l, a_l, params, batch_tile=128, whole_batch_max=0))
    ref_l = generator_reference(z_l, a_l, params, b1, b2)
    assert out_l.shape == (512, OUT_F)
    assert float(jnp.max(jnp.abs(out_l - ref_l))) < 1e-4

    print("KERNEL_OK")
</pallas_src>

<mosaic_0001>
module attributes {stable_mosaic.version = 11 : i64} {
  func.func @_whole_batch_kernel(%arg0: memref<8x4xf32, #tpu.memory_space<vmem>>, %arg1: memref<8x8xf32, #tpu.memory_space<vmem>>, %arg2: memref<4x20xf32, #tpu.memory_space<vmem>>, %arg3: memref<8x20xf32, #tpu.memory_space<vmem>>, %arg4: memref<20x10xf32, #tpu.memory_space<vmem>>, %arg5: memref<10x5xf32, #tpu.memory_space<vmem>>, %arg6: memref<5x20xf32, #tpu.memory_space<vmem>>, %arg7: memref<8x5xf32, #tpu.memory_space<vmem>>) attributes {dimension_semantics = [], scalar_prefetch = 0 : i64, scratch_operands = 0 : i64, tpu.core_type = #tpu.core_type<tc>} {
    %c0 = arith.constant 0 : index
    %c0_0 = arith.constant 0 : index
    %0 = vector.load %arg6[%c0, %c0_0] : memref<5x20xf32, #tpu.memory_space<vmem>>, vector<1x20xf32>
    %c1 = arith.constant 1 : index
    %c0_1 = arith.constant 0 : index
    %1 = vector.load %arg6[%c1, %c0_1] : memref<5x20xf32, #tpu.memory_space<vmem>>, vector<1x20xf32>
    %c2 = arith.constant 2 : index
    %c0_2 = arith.constant 0 : index
    %2 = vector.load %arg6[%c2, %c0_2] : memref<5x20xf32, #tpu.memory_space<vmem>>, vector<1x10xf32>
    %c3 = arith.constant 3 : index
    %c0_3 = arith.constant 0 : index
    %3 = vector.load %arg6[%c3, %c0_3] : memref<5x20xf32, #tpu.memory_space<vmem>>, vector<1x10xf32>
    %c4 = arith.constant 4 : index
    %c0_4 = arith.constant 0 : index
    %4 = vector.load %arg6[%c4, %c0_4] : memref<5x20xf32, #tpu.memory_space<vmem>>, vector<1x5xf32>
    %c0_5 = arith.constant 0 : index
    %c0_6 = arith.constant 0 : index
    %5 = vector.load %arg0[%c0_5, %c0_6] : memref<8x4xf32, #tpu.memory_space<vmem>>, vector<8x4xf32>
    %c0_7 = arith.constant 0 : index
    %c0_8 = arith.constant 0 : index
    %6 = vector.load %arg1[%c0_7, %c0_8] : memref<8x8xf32, #tpu.memory_space<vmem>>, vector<8x8xf32>
    %c0_9 = arith.constant 0 : index
    %c0_10 = arith.constant 0 : index
    %7 = vector.load %arg2[%c0_9, %c0_10] : memref<4x20xf32, #tpu.memory_space<vmem>>, vector<4x20xf32>
    %cst = arith.constant dense<0.000000e+00> : vector<8x20xf32>
    %8 = tpu.matmul %5, %7, %cst {dimension_numbers = #tpu.dot_dimension_numbers<[1], [0], [0], [1], [0, 0, 1, 1], [], []>} : vector<8x4xf32>, vector<4x20xf32>, vector<8x20xf32> -> vector<8x20xf32>
    %c0_11 = arith.constant 0 : index
    %c0_12 = arith.constant 0 : index
    %9 = vector.load %arg3[%c0_11, %c0_12] : memref<8x20xf32, #tpu.memory_space<vmem>>, vector<8x20xf32>
    %cst_13 = arith.constant dense<0.000000e+00> : vector<8x20xf32>
    %10 = tpu.matmul %6, %9, %cst_13 {dimension_numbers = #tpu.dot_dimension_numbers<[1], [0], [0], [1], [0, 0, 1, 1], [], []>} : vector<8x8xf32>, vector<8x20xf32>, vector<8x20xf32> -> vector<8x20xf32>
    %11 = arith.addf %8, %10 : vector<8x20xf32>
    %cst_14 = arith.constant dense<0.000000e+00> : vector<20xf32>
    %12 = vector.multi_reduction <add>, %11, %cst_14 [0] : vector<8x20xf32> to vector<20xf32>
    %13 = vector.shape_cast %12 : vector<20xf32> to vector<1x20xf32>
    %14 = arith.mulf %11, %11 : vector<8x20xf32>
    %cst_15 = arith.constant dense<0.000000e+00> : vector<20xf32>
    %15 = vector.multi_reduction <add>, %14, %cst_15 [0] : vector<8x20xf32> to vector<20xf32>
    %16 = vector.shape_cast %15 : vector<20xf32> to vector<1x20xf32>
    %cst_16 = arith.constant 1.250000e-01 : f32
    %17 = vector.broadcast %cst_16 : f32 to vector<1x20xf32>
    %18 = arith.mulf %13, %17 : vector<1x20xf32>
    %cst_17 = arith.constant 1.250000e-01 : f32
    %19 = vector.broadcast %cst_17 : f32 to vector<1x20xf32>
    %20 = arith.mulf %16, %19 : vector<1x20xf32>
    %21 = arith.mulf %18, %18 : vector<1x20xf32>
    %22 = arith.subf %20, %21 : vector<1x20xf32>
    %cst_18 = arith.constant 8.000000e-01 : f32
    %23 = vector.broadcast %cst_18 : f32 to vector<1x20xf32>
    %24 = arith.addf %22, %23 : vector<1x20xf32>
    %25 = math.rsqrt %24 : vector<1x20xf32>
    %26 = arith.mulf %0, %25 : vector<1x20xf32>
    %27 = arith.mulf %18, %26 : vector<1x20xf32>
    %28 = arith.subf %1, %27 : vector<1x20xf32>
    %29 = vector.broadcast %26 : vector<1x20xf32> to vector<8x20xf32>
    %30 = arith.mulf %11, %29 : vector<8x20xf32>
    %31 = vector.broadcast %28 : vector<1x20xf32> to vector<8x20xf32>
    %32 = arith.addf %30, %31 : vector<8x20xf32>
    %cst_19 = arith.constant 0.000000e+00 : f32
    %33 = vector.broadcast %cst_19 : f32 to vector<8x20xf32>
    %34 = arith.cmpf ogt, %32, %33 : vector<8x20xf32>
    %cst_20 = arith.constant 2.000000e-01 : f32
    %35 = vector.broadcast %cst_20 : f32 to vector<8x20xf32>
    %36 = arith.mulf %35, %32 : vector<8x20xf32>
    %37 = arith.select %34, %32, %36 : vector<8x20xi1>, vector<8x20xf32>
    %c0_21 = arith.constant 0 : index
    %c0_22 = arith.constant 0 : index
    %38 = vector.load %arg4[%c0_21, %c0_22] : memref<20x10xf32, #tpu.memory_space<vmem>>, vector<20x10xf32>
    %cst_23 = arith.constant dense<0.000000e+00> : vector<8x10xf32>
    %39 = tpu.matmul %37, %38, %cst_23 {dimension_numbers = #tpu.dot_dimension_numbers<[1], [0], [0], [1], [0, 0, 1, 1], [], []>} : vector<8x20xf32>, vector<20x10xf32>, vector<8x10xf32> -> vector<8x10xf32>
    %cst_24 = arith.constant dense<0.000000e+00> : vector<10xf32>
    %40 = vector.multi_reduction <add>, %39, %cst_24 [0] : vector<8x10xf32> to vector<10xf32>
    %41 = vector.shape_cast %40 : vector<10xf32> to vector<1x10xf32>
    %42 = arith.mulf %39, %39 : vector<8x10xf32>
    %cst_25 = arith.constant dense<0.000000e+00> : vector<10xf32>
    %43 = vector.multi_reduction <add>, %42, %cst_25 [0] : vector<8x10xf32> to vector<10xf32>
    %44 = vector.shape_cast %43 : vector<10xf32> to vector<1x10xf32>
    %cst_26 = arith.constant 1.250000e-01 : f32
    %45 = vector.broadcast %cst_26 : f32 to vector<1x10xf32>
    %46 = arith.mulf %41, %45 : vector<1x10xf32>
    %cst_27 = arith.constant 1.250000e-01 : f32
    %47 = vector.broadcast %cst_27 : f32 to vector<1x10xf32>
    %48 = arith.mulf %44, %47 : vector<1x10xf32>
    %49 = arith.mulf %46, %46 : vector<1x10xf32>
    %50 = arith.subf %48, %49 : vector<1x10xf32>
    %cst_28 = arith.constant 8.000000e-01 : f32
    %51 = vector.broadcast %cst_28 : f32 to vector<1x10xf32>
    %52 = arith.addf %50, %51 : vector<1x10xf32>
    %53 = math.rsqrt %52 : vector<1x10xf32>
    %54 = arith.mulf %2, %53 : vector<1x10xf32>
    %55 = arith.mulf %46, %54 : vector<1x10xf32>
    %56 = arith.subf %3, %55 : vector<1x10xf32>
    %57 = vector.broadcast %54 : vector<1x10xf32> to vector<8x10xf32>
    %58 = arith.mulf %39, %57 : vector<8x10xf32>
    %59 = vector.broadcast %56 : vector<1x10xf32> to vector<8x10xf32>
    %60 = arith.addf %58, %59 : vector<8x10xf32>
    %cst_29 = arith.constant 0.000000e+00 : f32
    %61 = vector.broadcast %cst_29 : f32 to vector<8x10xf32>
    %62 = arith.cmpf ogt, %60, %61 : vector<8x10xf32>
    %cst_30 = arith.constant 2.000000e-01 : f32
    %63 = vector.broadcast %cst_30 : f32 to vector<8x10xf32>
    %64 = arith.mulf %63, %60 : vector<8x10xf32>
    %65 = arith.select %62, %60, %64 : vector<8x10xi1>, vector<8x10xf32>
    %c0_31 = arith.constant 0 : index
    %c0_32 = arith.constant 0 : index
    %66 = vector.load %arg5[%c0_31, %c0_32] : memref<10x5xf32, #tpu.memory_space<vmem>>, vector<10x5xf32>
    %cst_33 = arith.constant dense<0.000000e+00> : vector<8x5xf32>
    %67 = tpu.matmul %65, %66, %cst_33 {dimension_numbers = #tpu.dot_dimension_numbers<[1], [0], [0], [1], [0, 0, 1, 1], [], []>} : vector<8x10xf32>, vector<10x5xf32>, vector<8x5xf32> -> vector<8x5xf32>
    %68 = vector.broadcast %4 : vector<1x5xf32> to vector<8x5xf32>
    %69 = arith.addf %67, %68 : vector<8x5xf32>
    %70 = math.tanh %69 : vector<8x5xf32>
    %c0_34 = arith.constant 0 : index
    %c0_35 = arith.constant 0 : index
    %71 = vector.load %arg7[%c0_34, %c0_35] : memref<8x5xf32, #tpu.memory_space<vmem>>, vector<8x5xf32>
    tpu.vector_store %arg7[%c0_34, %c0_35], %70 {strides = array<i32>} : memref<8x5xf32, #tpu.memory_space<vmem>>, vector<8x5xf32>,
    return
  }
}

</mosaic_0001>

<llo_original>
// kernel: tpu_custom_call.1
$region0: #{tpu_custom_call.1}
  #allocation0 [shape = 'u32[]', space=smem, size = 0x4, offset = 0x4, fixed_abs, tag = 'smem constant byte address 0x4 - core index']
  #allocation1 [shape = 'u32[72,128]{1,0:T(1,128)}', space=vmem, size = 0x9000, scoped, tag = 'internal scratch']
  %s0 = inlined_call_operand.vmem [shape: f32[8,4], index: 0, kind: input, shape index: {}]
  %s1 = inlined_call_operand.vmem [shape: f32[8,8], index: 1, kind: input, shape index: {}]
  %s2 = inlined_call_operand.vmem [shape: f32[4,20], index: 2, kind: input, shape index: {}]
  %s3 = inlined_call_operand.vmem [shape: f32[8,20], index: 3, kind: input, shape index: {}]
  %s4 = inlined_call_operand.vmem [shape: f32[20,10], index: 4, kind: input, shape index: {}]
  %s5 = inlined_call_operand.vmem [shape: f32[10,5], index: 5, kind: input, shape index: {}]
  %s6 = inlined_call_operand.vmem [shape: f32[5,20], index: 6, kind: input, shape index: {}]
  %s7 = inlined_call_operand.hbm [shape: f32[8,5], index: 7, kind: output, shape index: {}]
  %s8 = sld [smem:[#allocation0]]
  $region38: #{tpu_custom_call.1} parent=0
    _
  %s10 = ssub.s32 1, %s8
  %s11 = scalar_select 0, %s10, %s8
  $region1: #{tpu_custom_call.1} parent=0
    #allocation2 [shape = 'u8[4096]{0}', space=vmem, size = 0x1000, scoped, tag = 'output window, operand 0, single buffered']
    #allocation3 [shape = 's32[1]{0}', space=sflag, size = 0x4, scoped, tag = 'scoped memory for tpu_custom_call.1']
    %12 = vsyncpa [#allocation3], 0
    // Predicated region
    $region2: #{tpu_custom_call.1} parent=1 // pred_check
      _
    $region3: #{tpu_custom_call.1} parent=1 // pred_check_branch
      %14 = sbr.rel (0) target = $region5
    $region4: #{tpu_custom_call.1} parent=1 // pred_region
      _
    $region5: #{tpu_custom_call.1} parent=1 // pred_fallthru
      _
    // Predicated region
    $region6: #{tpu_custom_call.1} parent=1 // pred_check
      _
    $region7: #{tpu_custom_call.1} parent=1 // pred_check_branch
      %16 = sbr.rel (0) target = $region9
    $region8: #{tpu_custom_call.1} parent=1 // pred_region
      _
    $region9: #{tpu_custom_call.1} parent=1 // pred_fallthru
      _
    // Predicated region
    $region10: #{tpu_custom_call.1} parent=1 // pred_check
      _
    $region11: #{tpu_custom_call.1} parent=1 // pred_check_branch
      %18 = sbr.rel (0) target = $region13
    $region12: #{tpu_custom_call.1} parent=1 // pred_region
      _
    $region13: #{tpu_custom_call.1} parent=1 // pred_fallthru
      _
    // Predicated region
    $region14: #{tpu_custom_call.1} parent=1 // pred_check
      _
    $region15: #{tpu_custom_call.1} parent=1 // pred_check_branch
      %20 = sbr.rel (0) target = $region17
    $region16: #{tpu_custom_call.1} parent=1 // pred_region
      _
    $region17: #{tpu_custom_call.1} parent=1 // pred_fallthru
      _
    // Predicated region
    $region18: #{tpu_custom_call.1} parent=1 // pred_check
      _
    $region19: #{tpu_custom_call.1} parent=1 // pred_check_branch
      %22 = sbr.rel (0) target = $region21
    $region20: #{tpu_custom_call.1} parent=1 // pred_region
      _
    $region21: #{tpu_custom_call.1} parent=1 // pred_fallthru
      _
    // Predicated region
    $region22: #{tpu_custom_call.1} parent=1 // pred_check
      _
    $region23: #{tpu_custom_call.1} parent=1 // pred_check_branch
      %24 = sbr.rel (0) target = $region25
    $region24: #{tpu_custom_call.1} parent=1 // pred_region
      _
    $region25: #{tpu_custom_call.1} parent=1 // pred_fallthru
      _
    // Predicated region
    $region26: #{tpu_custom_call.1} parent=1 // pred_check
      _
    $region27: #{tpu_custom_call.1} parent=1 // pred_check_branch
      %26 = sbr.rel (0) target = $region29
    $region28: #{tpu_custom_call.1} parent=1 // pred_region
      _
    $region29: #{tpu_custom_call.1} parent=1 // pred_fallthru
      _
    %v27 = vld [vmem:[%s6] sm:$0x1]
    %v28 = vld [vmem:[%s6 + $0x1] sm:$0x1]
    %v29 = vld [vmem:[%s6 + $0x2] sm:$0x1]
    %v30 = vld [vmem:[%s6 + $0x3] sm:$0x1]
    %v31 = vld [vmem:[%s6 + $0x4] sm:$0x1]
    %v32 = vld [vmem:[%s0] sm:$0xff]
    %v33 = vld [vmem:[%s1] sm:$0xff]
    %v34 = vld [vmem:[%s2] sm:$0xf]
    %v35 = vld [vmem:[%s3] sm:$0xff]
    %vm36 = vcmask 64512
    %v38 = vsel %vm36, %v33, 0
    %40 = vmatpush.msra.mxu0 0.0
    %41 = vmatpush.msra.mxu0 0.0
    %42 = vmatpush.msra.mxu0 0.0
    %43 = vmatpush.msra.mxu0 0.0
    %44 = vmatpush.msra.mxu0 0.0
    %45 = vmatpush.msra.mxu0 0.0
    %46 = vmatpush.msra.mxu0 0.0
    %47 = vmatpush.msra.mxu0 0.0
    %48 = vmatpush.msra.mxu0 0.0
    %49 = vmatpush.msra.mxu0 0.0
    %50 = vmatpush.msra.mxu0 0.0
    %51 = vmatpush.msra.mxu0 0.0
    %52 = vmatpush.msra.mxu0 0.0
    %53 = vmatpush.msra.mxu0 0.0
    %54 = vmatpush.msra.mxu0 0.0
    %55 = vmatpush.msra.mxu0 %v35
    %56 = vmatmul.f32.gmra.mxu0 %v38
    %v57 = vpop.f32.mrf.mxu0
    %v58 = vadd.f32 0.0, %v57
    %59 = vdwg.mxu0
    %vm60 = vcmask 31744
    %v62 = vsel %vm60, %v32, 0
    %vm64 = vcmask 1043456
    %v66 = vsel %vm64, %v34, 0
    %68 = vmatpush.msra.mxu0 0.0
    %69 = vmatpush.msra.mxu0 0.0
    %70 = vmatpush.msra.mxu0 0.0
    %71 = vmatpush.msra.mxu0 0.0
    %72 = vmatpush.msra.mxu0 0.0
    %73 = vmatpush.msra.mxu0 0.0
    %74 = vmatpush.msra.mxu0 0.0
    %75 = vmatpush.msra.mxu0 0.0
    %76 = vmatpush.msra.mxu0 0.0
    %77 = vmatpush.msra.mxu0 0.0
    %78 = vmatpush.msra.mxu0 0.0
    %79 = vmatpush.msra.mxu0 0.0
    %80 = vmatpush.msra.mxu0 0.0
    %81 = vmatpush.msra.mxu0 0.0
    %82 = vmatpush.msra.mxu0 0.0
    %83 = vmatpush.msra.mxu0 %v66
    %84 = vmatmul.f32.gmra.mxu0 %v62
    %v85 = vpop.f32.mrf.mxu0
    %v86 = vadd.f32 %v58, %v85
    %87 = vdwg.mxu0
    %vm88 = vcmask 162816
    %v89 = vsel %vm88, %v86, 0.0
    %v90 = vrot.slane %v89, 4
    %v91 = vadd.f32 %v89, %v90
    %v92 = vrot.slane %v91, 2
    %v93 = vadd.f32 %v91, %v92
    %v94 = vrot.slane %v93, 1
    %v95 = vadd.f32 %v93, %v94
    %v96 = vmul.f32 %v86, %v86
    %v97 = vsel %vm88, %v96, 0.0
    %v98 = vrot.slane %v97, 4
    %v99 = vadd.f32 %v97, %v98
    %v100 = vrot.slane %v99, 2
    %v101 = vadd.f32 %v99, %v100
    %v102 = vrot.slane %v101, 1
    %v103 = vadd.f32 %v101, %v102
    %v104 = vmul.f32 %v95, 0.125
    %v105 = vmul.f32 %v103, 0.125
    %v106 = vmul.f32 %v104, %v104
    %v107 = vsub.f32 %v105, %v106
    %v108 = vadd.f32 %v107, 0.8
    %v109 = vrsqrt.pop %v108
    %v110 = vmul.f32 %v109, %v108
    %v111 = vmul.f32 %v110, %v109
    %v112 = vmul.f32 0.5, %v111
    %v113 = vsub.f32 1.5, %v112
    %v114 = vmul.f32 %v109, %v113
    %vm115 = vweird.f32 %v108
    %vm116 = vweird.f32 %v109
    %vm117 = vmor %vm115, %vm116
    %v118 = vsel %vm117, %v109, %v114
    %v119 = vmul.f32 %v27, %v118
    %v120 = vmul.f32 %v104, %v119
    %v121 = vsub.f32 %v28, %v120
    %v122 = vperm.slane %v119, 0
    %v123 = vmul.f32 %v86, %v122
    %v124 = vperm.slane %v121, 0
    %v125 = vadd.f32 %v123, %v124
    %vm126 = vcmp.gt.f32.partialorder %v125, 0.0
    %v127 = vmul.f32 %v125, 0.2
    %v128 = vsel %vm126, %v125, %v127
    %v129 = vld [vmem:[%s4] sm:$0xff]
    %v130 = vld [vmem:[%s4 + $0x8] sm:$0xff]
    %v131 = vld [vmem:[%s4 + $0x10] sm:$0xf]
    %v133 = vsel %vm88, %v128, 0
    %v136 = vsel %vm64, %v131, 0
    %138 = vmatpush.msra.mxu0 0.0
    %139 = vmatpush.msra.mxu0 0.0
    %140 = vmatpush.msra.mxu0 0.0
    %141 = vmatpush.msra.mxu0 0.0
    %142 = vmatpush.msra.mxu0 0.0
    %143 = vmatpush.msra.mxu0 0.0
    %144 = vmatpush.msra.mxu0 0.0
    %145 = vmatpush.msra.mxu0 0.0
    %146 = vmatpush.msra.mxu0 0.0
    %147 = vmatpush.msra.mxu0 0.0
    %148 = vmatpush.msra.mxu0 0.0
    %149 = vmatpush.msra.mxu0 0.0
    %150 = vmatpush.msra.mxu0 0.0
    %151 = vmatpush.msra.mxu0 %v136
    %152 = vmatpush.msra.mxu0 %v130
    %153 = vmatpush.msra.mxu0 %v129
    %154 = vmatmul.f32.gmra.mxu0 %v133
    %v155 = vpop.f32.mrf.mxu0
    %v156 = vadd.f32 0.0, %v155
    %157 = vdwg.mxu0
    %vm158 = vcmask 80896
    %v159 = vsel %vm158, %v156, 0.0
    %v160 = vrot.slane %v159, 4
    %v161 = vadd.f32 %v159, %v160
    %v162 = vrot.slane %v161, 2
    %v163 = vadd.f32 %v161, %v162
    %v164 = vrot.slane %v163, 1
    %v165 = vadd.f32 %v163, %v164
    %v166 = vmul.f32 %v156, %v156
    %v167 = vsel %vm158, %v166, 0.0
    %v168 = vrot.slane %v167, 4
    %v169 = vadd.f32 %v167, %v168
    %v170 = vrot.slane %v169, 2
    %v171 = vadd.f32 %v169, %v170
    %v172 = vrot.slane %v171, 1
    %v173 = vadd.f32 %v171, %v172
    %v174 = vmul.f32 %v165, 0.125
    %v175 = vmul.f32 %v173, 0.125
    %v176 = vmul.f32 %v174, %v174
    %v177 = vsub.f32 %v175, %v176
    %v178 = vadd.f32 %v177, 0.8
    %v179 = vrsqrt.pop %v178
    %v180 = vmul.f32 %v179, %v178
    %v181 = vmul.f32 %v180, %v179
    %v182 = vmul.f32 0.5, %v181
    %v183 = vsub.f32 1.5, %v182
    %v184 = vmul.f32 %v179, %v183
    %vm185 = vweird.f32 %v178
    %vm186 = vweird.f32 %v179
    %vm187 = vmor %vm185, %vm186
    %v188 = vsel %vm187, %v179, %v184
    %v189 = vmul.f32 %v29, %v188
    %v190 = vmul.f32 %v174, %v189
    %v191 = vsub.f32 %v30, %v190
    %v192 = vperm.slane %v189, 0
    %v193 = vmul.f32 %v156, %v192
    %v194 = vperm.slane %v191, 0
    %v195 = vadd.f32 %v193, %v194
    %vm196 = vcmp.gt.f32.partialorder %v195, 0.0
    %v197 = vmul.f32 %v195, 0.2
    %v198 = vsel %vm196, %v195, %v197
    %v199 = vld [vmem:[%s5] sm:$0xff]
    %v200 = vld [vmem:[%s5 + $0x8] sm:$0x3]
    %v201 = vperm.slane %v31, 0
    %v203 = vsel %vm158, %v198, 0
    %vm205 = vcmask 1041408
    %v207 = vsel %vm205, %v200, 0
    %209 = vmatpush.msra.mxu0 0.0
    %210 = vmatpush.msra.mxu0 0.0
    %211 = vmatpush.msra.mxu0 0.0
    %212 = vmatpush.msra.mxu0 0.0
    %213 = vmatpush.msra.mxu0 0.0
    %214 = vmatpush.msra.mxu0 0.0
    %215 = vmatpush.msra.mxu0 0.0
    %216 = vmatpush.msra.mxu0 0.0
    %217 = vmatpush.msra.mxu0 0.0
    %218 = vmatpush.msra.mxu0 0.0
    %219 = vmatpush.msra.mxu0 0.0
    %220 = vmatpush.msra.mxu0 0.0
    %221 = vmatpush.msra.mxu0 0.0
    %222 = vmatpush.msra.mxu0 0.0
    %223 = vmatpush.msra.mxu0 %v207
    %224 = vmatpush.msra.mxu0 %v199
    %225 = vmatmul.f32.gmra.mxu0 %v203
    %v226 = vpop.f32.mrf.mxu0
    %v227 = vadd.f32 %v201, %v226
    %228 = vdwg.mxu0
    %v229 = vtanh.pop %v227
    %vm230 = vcmask 39936
    %231 = vst.msk [vmem:[#allocation2] sm:$0xff] %vm230, %v229
    // Predicated region
    $region30: #{tpu_custom_call.1} parent=1 // pred_check
      _
    $region31: #{tpu_custom_call.1} parent=1 // pred_check_branch
      %233 = sbr.rel (0) target = $region33
    $region32: #{tpu_custom_call.1} parent=1 // pred_region
      %235 = vsyncadd [#allocation3], 0
      %s237 = sshll.u32 [#allocation2], 4
      %s238 = int_to_ptr.vmem [resolvable:$true] %s237
      %s239 = sshll.u32 %s7, 4
      %s240 = int_to_ptr.hbm [resolvable:$true] %s239
      %242 = dma.vmem_to_hbm [thread:$0]  %s238, 128, %s240, [#allocation3]
    $region33: #{tpu_custom_call.1} parent=1 // pred_fallthru
      _
    // Predicated region
    $region34: #{tpu_custom_call.1} parent=1 // pred_check
      _
    $region35: #{tpu_custom_call.1} parent=1 // pred_check_branch
      %244 = sbr.rel (0) target = $region37
    $region36: #{tpu_custom_call.1} parent=1 // pred_region
      %246 = dma.done [#allocation3], 128
    $region37: #{tpu_custom_call.1} parent=1 // pred_fallthru
      _
    %247 = vsyncpa [#allocation3], 1

</llo_original>
